<compile_context>
chip_gen: v5e
topology: v5e:2x2
jax: 0.10.0
libtpu: 0.0.40
codegen_flags: <defaults>
</compile_context>

<pallas_src>
import functools

import jax
import jax.numpy as jnp
import numpy as np
from jax import lax
from jax.experimental import pallas as pl
from jax.experimental.pallas import tpu as pltpu

# 1-D Gaussian taps; the 5x5 kernel is their (separable) outer product.
_TAPS = (0.05, 0.25, 0.4, 0.25, 0.05)


# ---------------------------------------------------------------------------
# Host-side: banded Laplacian operators for the MXU path.
# ---------------------------------------------------------------------------
def _blur_matrix_np(n):
    """A[i, j] = sum_k taps[k] * [clamp(i + k - 2, 0, n-1) == j].

    Row blur with replicate padding is then `A @ img`; column blur is
    `img @ A.T` (with A built for n = W).
    """
    A = np.zeros((n, n), np.float64)
    idx = np.arange(n)
    for k, t in zip(range(-2, 3), _TAPS):
        j = np.clip(idx + k, 0, n - 1)
        np.add.at(A, (idx, j), t)
    return A


def _laplacian_operators(H, W):
    """lap(d) = d - L_H @ d @ L_W  (blur -> 4*even-mask -> blur, folded)."""
    A_h = _blur_matrix_np(H)
    A_w = _blur_matrix_np(W)
    even_h = (np.arange(H) % 2 == 0).astype(np.float64)
    even_w = (np.arange(W) % 2 == 0).astype(np.float64)
    # 4 * even_mask * T  ==  diag(2*even_h) @ T @ diag(2*even_w)
    L_H = A_h @ (2.0 * even_h[:, None] * A_h)            # (H, H)
    L_W = (A_w.T * (2.0 * even_w)[None, :]) @ A_w.T      # (W, W)
    return jnp.asarray(L_H, jnp.float32), jnp.asarray(L_W, jnp.float32)


# ---------------------------------------------------------------------------
# Kernels: one grid step = one (batch, channel) plane of x and y.
# ---------------------------------------------------------------------------
def _edge_loss_kernel_mxu(x_ref, y_ref, lh_ref, lw_ref, out_ref, *, eps):
    """MXU path: Laplacian of (x - y) as two banded matmuls."""
    d = x_ref[...].astype(jnp.float32) - y_ref[...].astype(jnp.float32)
    t = jnp.dot(lh_ref[...], d,
                precision=lax.Precision.HIGHEST,
                preferred_element_type=jnp.float32)
    lap = d - jnp.dot(t, lw_ref[...],
                      precision=lax.Precision.HIGHEST,
                      preferred_element_type=jnp.float32)
    charb = jnp.sqrt(lap * lap + jnp.float32(eps * eps))
    out_ref[...] = jnp.sum(charb, keepdims=True)      # per-plane partial sum


def _blur5_replicate(x, axis, lo_masks, hi_masks):
    """5-tap blur along `axis` with edge replication (rolls + hoisted masks)."""
    n = x.shape[axis]
    lo = lax.slice_in_dim(x, 0, 1, axis=axis)        # edge value at index 0
    hi = lax.slice_in_dim(x, n - 1, n, axis=axis)    # edge value at index n-1
    out = _TAPS[2] * x
    for s in (1, 2):
        # x[clamp(i - s, 0)] : roll forward by s, first s entries -> lo edge
        minus = jnp.where(lo_masks[s - 1], lo, pltpu.roll(x, s, axis))
        # x[clamp(i + s, n-1)] : roll backward by s, last s entries -> hi edge
        plus = jnp.where(hi_masks[s - 1], hi, pltpu.roll(x, n - s, axis))
        out = out + _TAPS[2 - s] * minus + _TAPS[2 + s] * plus
    return out


def _edge_loss_kernel_roll(x_ref, y_ref, out_ref, *, eps):
    """VPU/XLU path (use_mxu=False): roll-based separable blur."""
    H, W = x_ref.shape
    d = x_ref[...].astype(jnp.float32) - y_ref[...].astype(jnp.float32)

    # Iotas / boundary / parity masks hoisted: built once, reused by all passes.
    rows = lax.broadcasted_iota(jnp.int32, (H, W), 0)
    cols = lax.broadcasted_iota(jnp.int32, (H, W), 1)
    r_lo = (rows < 1, rows < 2)
    r_hi = (rows >= H - 1, rows >= H - 2)
    c_lo = (cols < 1, cols < 2)
    c_hi = (cols >= W - 1, cols >= W - 2)
    keep = jnp.logical_and((rows & 1) == 0, (cols & 1) == 0)

    def blur(t):
        return _blur5_replicate(
            _blur5_replicate(t, 0, r_lo, r_hi), 1, c_lo, c_hi)

    filtered = blur(d)
    up4 = jnp.where(keep, filtered * 4.0, 0.0)   # down[::2,::2]*4 zero-upsampled
    lap = d - blur(up4)
    charb = jnp.sqrt(lap * lap + jnp.float32(eps * eps))
    out_ref[...] = jnp.sum(charb, keepdims=True)      # per-plane partial sum


# ---------------------------------------------------------------------------
# Wrapper
# ---------------------------------------------------------------------------
def edge_loss(x, y, *, eps=1e-3, use_mxu=True):
    """Pallas TPU equivalent of EdgeLoss.forward(x, y) for NCHW inputs."""
    if x.ndim != 4 or x.shape != y.shape:
        raise ValueError(f"expected matching NCHW inputs, got {x.shape} / {y.shape}")
    N, C, H, W = x.shape
    inv_count = 1.0 / float(N * C * H * W)

    plane_spec = pl.BlockSpec((None, None, H, W), lambda n, c: (n, c, 0, 0))
    out_spec = pl.BlockSpec((None, None, 1, 1), lambda n, c: (n, c, 0, 0))
    out_shape = jax.ShapeDtypeStruct((N, C, 1, 1), jnp.float32)

    # VMEM budget: 2 inputs x 2 pipeline buffers + f32 temporaries
    # (+ resident L_H / L_W on the MXU path), with headroom.
    itemsize = jnp.dtype(x.dtype).itemsize
    plane_f32 = H * W * 4
    est = 4 * H * W * itemsize + (6 if use_mxu else 12) * plane_f32
    if use_mxu:
        est += 2 * (H * H + W * W) * 4
    vmem_limit = int(min(max(est + (1 << 20), 32 * 1024 * 1024),
                         64 * 1024 * 1024))

    params = pltpu.CompilerParams(
        # Each grid step writes its own output block -> fully parallel grid.
        dimension_semantics=("parallel", "parallel"),
        vmem_limit_bytes=vmem_limit,
    )

    if use_mxu:
        L_H, L_W = _laplacian_operators(H, W)
        kernel = functools.partial(_edge_loss_kernel_mxu, eps=float(eps))
        partials = pl.pallas_call(
            kernel,
            out_shape=out_shape,
            grid=(N, C),
            in_specs=[
                plane_spec,
                plane_spec,
                # Constant block index -> operators stay resident in VMEM.
                pl.BlockSpec((H, H), lambda n, c: (0, 0)),
                pl.BlockSpec((W, W), lambda n, c: (0, 0)),
            ],
            out_specs=out_spec,
            compiler_params=params,
        )(x, y, L_H, L_W)
    else:
        kernel = functools.partial(_edge_loss_kernel_roll, eps=float(eps))
        partials = pl.pallas_call(
            kernel,
            out_shape=out_shape,
            grid=(N, C),
            in_specs=[plane_spec, plane_spec],
            out_specs=out_spec,
            compiler_params=params,
        )(x, y)

    # TODO(synk): for very large H*W add row-band spatial tiling with a
    # 4-pixel halo (two chained radius-2 blurs), global (not tile-local) row
    # parity for the even mask, and replicate padding only at true image
    # borders, so one plane + operators need not fit v7x's 64 MiB VMEM.
    return jnp.sum(partials) * jnp.float32(inv_count)


# ---------------------------------------------------------------------------
# Pure-JAX (XLA) reference that mirrors the PyTorch module, for validation.
# ---------------------------------------------------------------------------
def _ref_conv_gauss(img, k2d):
    C = img.shape[1]
    imgp = jnp.pad(img, ((0, 0), (0, 0), (2, 2), (2, 2)), mode="edge")
    kern = jnp.broadcast_to(k2d, (C, 1, 5, 5)).astype(img.dtype)
    return lax.conv_general_dilated(
        imgp, kern, window_strides=(1, 1), padding="VALID",
        dimension_numbers=("NCHW", "OIHW", "NCHW"),
        feature_group_count=C)


def _ref_laplacian(img, k2d):
    filtered = _ref_conv_gauss(img, k2d)
    down = filtered[:, :, ::2, ::2]
    new_filter = jnp.zeros_like(filtered).at[:, :, ::2, ::2].set(down * 4.0)
    filtered = _ref_conv_gauss(new_filter, k2d)
    return img - filtered


def _ref_edge_loss(x, y, eps=1e-3):
    k1 = jnp.asarray(_TAPS, dtype=jnp.float32).reshape(1, 5)
    k2d = k1.T @ k1
    d = _ref_laplacian(x, k2d) - _ref_laplacian(y, k2d)
    return jnp.mean(jnp.sqrt(d * d + eps * eps))


if __name__ == "__main__":
    key = jax.random.PRNGKey(0)
    kx, ky = jax.random.split(key)

    # EdgeLoss hard-codes 3 channels (the 5x5 Gaussian is repeated 3x, groups=3).
    N, C, H, W = 2, 3, 16, 16
    x = jax.random.normal(kx, (N, C, H, W), dtype=jnp.float32)
    y = x + 0.1 * jax.random.normal(ky, (N, C, H, W), dtype=jnp.float32)

    ref = _ref_edge_loss(x, y)

    # Default (MXU banded-matmul) path.
    loss_mxu = jax.block_until_ready(jax.jit(edge_loss)(x, y))
    assert jnp.isfinite(loss_mxu), "MXU-path loss is not finite"
    assert jnp.allclose(loss_mxu, ref, rtol=2e-3, atol=1e-5), (loss_mxu, ref)

    # Roll/VPU fallback path (preferred on v5e) — tight tolerance check.
    loss_roll = jax.block_until_ready(
        jax.jit(functools.partial(edge_loss, use_mxu=False))(x, y))
    assert jnp.isfinite(loss_roll), "roll-path loss is not finite"
    assert jnp.allclose(loss_roll, ref, rtol=5e-5, atol=1e-6), (loss_roll, ref)

    print("KERNEL_OK")
</pallas_src>

<mosaic_0001>
module attributes {stable_mosaic.version = 11 : i64} {
  func.func @_edge_loss_kernel_mxu(%arg0: i32, %arg1: i32, %arg2: memref<1x1x16x16xf32, #tpu.memory_space<vmem>>, %arg3: memref<1x1x16x16xf32, #tpu.memory_space<vmem>>, %arg4: memref<16x16xf32, #tpu.memory_space<vmem>>, %arg5: memref<16x16xf32, #tpu.memory_space<vmem>>, %arg6: memref<1x1x1x1xf32, #tpu.memory_space<vmem>>) attributes {dimension_semantics = [#tpu.dimension_semantics<parallel>, #tpu.dimension_semantics<parallel>], iteration_bounds = array<i64: 2, 3>, scalar_prefetch = 0 : i64, scratch_operands = 0 : i64, tpu.core_type = #tpu.core_type<tc>, window_params = [{transform_indices = @transform_0, window_bounds = array<i64: 1, 1, 16, 16>}, {transform_indices = @transform_1, window_bounds = array<i64: 1, 1, 16, 16>}, {pipeline_mode = #tpu.pipeline_mode<synchronous>, transform_indices = @transform_2, window_bounds = array<i64: 16, 16>}, {pipeline_mode = #tpu.pipeline_mode<synchronous>, transform_indices = @transform_3, window_bounds = array<i64: 16, 16>}, {transform_indices = @transform_4, window_bounds = array<i64: 1, 1, 1, 1>}]} {
    %c0 = arith.constant 0 : index
    %c0_0 = arith.constant 0 : index
    %c0_1 = arith.constant 0 : index
    %c0_2 = arith.constant 0 : index
    %0 = vector.load %arg2[%c0, %c0_0, %c0_1, %c0_2] : memref<1x1x16x16xf32, #tpu.memory_space<vmem>>, vector<1x1x16x16xf32>
    %1 = vector.shape_cast %0 : vector<1x1x16x16xf32> to vector<16x16xf32>
    %c0_3 = arith.constant 0 : index
    %c0_4 = arith.constant 0 : index
    %c0_5 = arith.constant 0 : index
    %c0_6 = arith.constant 0 : index
    %2 = vector.load %arg3[%c0_3, %c0_4, %c0_5, %c0_6] : memref<1x1x16x16xf32, #tpu.memory_space<vmem>>, vector<1x1x16x16xf32>
    %3 = vector.shape_cast %2 : vector<1x1x16x16xf32> to vector<16x16xf32>
    %4 = arith.subf %1, %3 : vector<16x16xf32>
    %c0_7 = arith.constant 0 : index
    %c0_8 = arith.constant 0 : index
    %5 = vector.load %arg4[%c0_7, %c0_8] : memref<16x16xf32, #tpu.memory_space<vmem>>, vector<16x16xf32>
    %cst = arith.constant dense<0.000000e+00> : vector<16x16xf32>
    %6 = tpu.matmul %5, %4, %cst {dimension_numbers = #tpu.dot_dimension_numbers<[1], [0], [0], [1], [0, 0, 1, 1], [], []>, precision = #tpu.contract_precision<fp32>} : vector<16x16xf32>, vector<16x16xf32>, vector<16x16xf32> -> vector<16x16xf32>
    %c0_9 = arith.constant 0 : index
    %c0_10 = arith.constant 0 : index
    %7 = vector.load %arg5[%c0_9, %c0_10] : memref<16x16xf32, #tpu.memory_space<vmem>>, vector<16x16xf32>
    %cst_11 = arith.constant dense<0.000000e+00> : vector<16x16xf32>
    %8 = tpu.matmul %6, %7, %cst_11 {dimension_numbers = #tpu.dot_dimension_numbers<[1], [0], [0], [1], [0, 0, 1, 1], [], []>, precision = #tpu.contract_precision<fp32>} : vector<16x16xf32>, vector<16x16xf32>, vector<16x16xf32> -> vector<16x16xf32>
    %9 = arith.subf %4, %8 : vector<16x16xf32>
    %10 = arith.mulf %9, %9 : vector<16x16xf32>
    %cst_12 = arith.constant 9.99999997E-7 : f32
    %11 = vector.broadcast %cst_12 : f32 to vector<16x16xf32>
    %12 = arith.addf %10, %11 : vector<16x16xf32>
    %13 = math.sqrt %12 : vector<16x16xf32>
    %14 = vector.shape_cast %13 : vector<16x16xf32> to vector<1x16x16xf32>
    %cst_13 = arith.constant dense<0.000000e+00> : vector<1xf32>
    %15 = vector.multi_reduction <add>, %14, %cst_13 [1, 2] : vector<1x16x16xf32> to vector<1xf32>
    %16 = vector.shape_cast %15 : vector<1xf32> to vector<1x1x1xf32>
    %17 = vector.extract %16[0, 0, 0] : f32 from vector<1x1x1xf32>
    %18 = vector.broadcast %17 : f32 to vector<1x1xf32>
    %c0_14 = arith.constant 0 : index
    %c0_15 = arith.constant 0 : index
    %c0_16 = arith.constant 0 : index
    %c0_17 = arith.constant 0 : index
    %19 = vector.load %arg6[%c0_14, %c0_15, %c0_16, %c0_17] : memref<1x1x1x1xf32, #tpu.memory_space<vmem>>, vector<1x1x1x1xf32>
    %20 = vector.shape_cast %19 : vector<1x1x1x1xf32> to vector<1x1xf32>
    %21 = vector.shape_cast %18 : vector<1x1xf32> to vector<1x1x1x1xf32>
    tpu.vector_store %arg6[%c0_14, %c0_15, %c0_16, %c0_17], %21 {strides = array<i32>} : memref<1x1x1x1xf32, #tpu.memory_space<vmem>>, vector<1x1x1x1xf32>,
    return
  }
  func.func @transform_0(%arg0: i32, %arg1: i32) -> (i32, i32, i32, i32) {
    %c0_i32 = arith.constant 0 : i32
    %c0_i32_0 = arith.constant 0 : i32
    %c0_i32_1 = arith.constant 0 : i32
    return %arg0, %arg1, %c0_i32, %c0_i32_0 : i32, i32, i32, i32
  }
  func.func @transform_1(%arg0: i32, %arg1: i32) -> (i32, i32, i32, i32) {
    %c0_i32 = arith.constant 0 : i32
    %c0_i32_0 = arith.constant 0 : i32
    %c0_i32_1 = arith.constant 0 : i32
    return %arg0, %arg1, %c0_i32, %c0_i32_0 : i32, i32, i32, i32
  }
  func.func @transform_2(%arg0: i32, %arg1: i32) -> (i32, i32) {
    %c0_i32 = arith.constant 0 : i32
    %c0_i32_0 = arith.constant 0 : i32
    %c0_i32_1 = arith.constant 0 : i32
    return %c0_i32, %c0_i32_0 : i32, i32
  }
  func.func @transform_3(%arg0: i32, %arg1: i32) -> (i32, i32) {
    %c0_i32 = arith.constant 0 : i32
    %c0_i32_0 = arith.constant 0 : i32
    %c0_i32_1 = arith.constant 0 : i32
    return %c0_i32, %c0_i32_0 : i32, i32
  }
  func.func @transform_4(%arg0: i32, %arg1: i32) -> (i32, i32, i32, i32) {
    %c0_i32 = arith.constant 0 : i32
    %c0_i32_0 = arith.constant 0 : i32
    %c0_i32_1 = arith.constant 0 : i32
    return %arg0, %arg1, %c0_i32, %c0_i32_0 : i32, i32, i32, i32
  }
}

</mosaic_0001>

<llo_original>
// kernel: edge_loss.1
$region0: #{edge_loss.1}
  #allocation0 [shape = 'u32[]', space=smem, size = 0x4, offset = 0x4, fixed_abs, tag = 'smem constant byte address 0x4 - core index']
  #allocation1 [shape = 'u32[72,128]{1,0:T(1,128)}', space=vmem, size = 0x9000, scoped, tag = 'internal scratch']
  %s0 = inlined_call_operand.hbm [shape: f32[2,3,16,16], index: 0, kind: input, shape index: {}]
  %s1 = inlined_call_operand.hbm [shape: f32[2,3,16,16], index: 1, kind: input, shape index: {}]
  %s2 = inlined_call_operand.hbm [shape: f32[16,16], index: 2, kind: input, shape index: {}]
  %s3 = inlined_call_operand.hbm [shape: f32[16,16], index: 3, kind: input, shape index: {}]
  %s4 = inlined_call_operand.vmem [shape: f32[2,3,1,1], index: 4, kind: output, shape index: {}]
  %s5 = sld [smem:[#allocation0]]
  $region65: #{edge_loss.1} parent=0
    _
  %s7 = ssub.s32 1, %s5
  %s8 = scalar_select 0, %s7, %s5
  $region1: #{edge_loss.1} parent=0
    #allocation2 [shape = 'u8[16384]{0}', space=vmem, size = 0x4000, scoped, tag = 'input window, operand 0']
    #allocation3 [shape = 's32[2]{0}', space=sflag, size = 0x8, scoped, tag = 'scoped memory for edge_loss.1']
    #allocation4 [shape = 'u8[16384]{0}', space=vmem, size = 0x4000, scoped, tag = 'input window, operand 1']
    #allocation5 [shape = 's32[2]{0}', space=sflag, size = 0x8, scoped, tag = 'scoped memory for edge_loss.1']
    #allocation6 [shape = 'u8[8192]{0}', space=vmem, size = 0x2000, scoped, tag = 'input window, operand 2, single buffered']
    #allocation7 [shape = 'u8[8192]{0}', space=vmem, size = 0x2000, scoped, tag = 'input window, operand 3, single buffered']
    #allocation8 [shape = 's32[1]{0}', space=sflag, size = 0x4, scoped, tag = 'scoped memory for edge_loss.1']
    %9 = vsyncpa [#allocation3], 0
    %s10 = scalar_lea.sflag [#allocation3], 1
    %11 = vsyncpa %s10, 0
    %12 = vsyncpa [#allocation5], 0
    %s13 = scalar_lea.sflag [#allocation5], 1
    %14 = vsyncpa %s13, 0
    %15 = vsyncpa [#allocation8], 0
    loop: start=0, step=1, limit=8
    $region2: #{edge_loss.1} parent=1 // loop_pre_header
      _
    $region3: #{edge_loss.1} parent=1 // loop_header
      %s17 = sphi 0, %s21
      %p18 = scmp.ge.s32.totalorder %s17, 8
      %s24 = sphi 0, %s36
      %s25 = sphi 0, %s32
      %s26 = sphi 0, %s24
      %s27 = sphi 0, %s25
      %s28 = sphi 0, %s26
      %s29 = sphi 0, %s27
      %s41 = sphi 0, %s43
      %s44 = sphi 0, %s41
      %s45 = sphi 0, %s44
      %s61 = sphi 0, %s45
      %s69 = sphi 0, %s71
      %s72 = sphi 0, %s69
      %s73 = sphi 0, %s72
      %s89 = sphi 0, %s73
      %s93 = sphi 0, %s93
      %s95 = sphi 0, %s93
      %s96 = sphi 0, %s95
      %s110 = sphi 0, %s96
      %s114 = sphi 0, %s114
      %s116 = sphi 0, %s114
      %s117 = sphi 0, %s116
      %s131 = sphi 0, %s117
      %s139 = sphi 0, %s141
      %s142 = sphi 0, %s139
      %s143 = sphi 0, %s142
      %s159 = sphi 0, %s143
    $region4: #{edge_loss.1} parent=1 // loop_header_branch
      %20 = sbr.rel (%p18) target = $region8
    $region5: #{edge_loss.1} parent=1 // loop_body
      %s22 = ssub.s32 %s17, 1
      %s23 = ssub.s32 %s17, 2
      %s30 = sadd.s32 1, %s25
      %p31 = scmp.ge.s32.totalorder %s30, 3
      %s32 = scalar_select %p31, 0, %s30
      %s33 = sadd.s32 1, %s24
      %s34 = scalar_select %p31, %s33, %s24
      %p35 = scmp.ge.s32.totalorder %s34, 2
      %s36 = scalar_select %p35, 0, %s34
      %s37 = ssub.s32 %s24, %s36
      %s38 = ssub.s32 %s25, %s32
      %s39 = sor.u32 %s37, %s38
      %p40 = scmp.eq.s32.totalorder %s39, 0
      %s42 = sadd.s32 %s41, 1
      %s43 = scalar_select %p40, %s41, %s42
      %p46 = pneg %p40
      %p47 = scmp.eq.s32.totalorder %s17, 5
      %p48 = por %p46, %p47
      %p49 = scmp.ne.s32.totalorder %s41, %s44
      %p50 = scmp.eq.s32.totalorder %s17, 0
      %p51 = por %p49, %p50
      %p52 = scmp.ne.s32.totalorder %s41, %s44
      %p53 = scmp.eq.s32.totalorder %s22, 5
      %p54 = por %p52, %p53
      %p55 = scmp.ne.s32.totalorder %s44, %s45
      %p56 = scmp.eq.s32.totalorder %s22, 0
      %p57 = por %p55, %p56
      %p58 = scmp.ne.s32.totalorder %s44, %s45
      %p59 = scmp.eq.s32.totalorder %s23, 5
      %p60 = por %p58, %p59
      %p62 = scmp.ne.s32.totalorder %s45, %s61
      %p63 = scmp.eq.s32.totalorder %s23, 0
      %p64 = por %p62, %p63
      %s65 = ssub.s32 %s24, %s36
      %s66 = ssub.s32 %s25, %s32
      %s67 = sor.u32 %s65, %s66
      %p68 = scmp.eq.s32.totalorder %s67, 0
      %s70 = sadd.s32 %s69, 1
      %s71 = scalar_select %p68, %s69, %s70
      %p74 = pneg %p68
      %p75 = scmp.eq.s32.totalorder %s17, 5
      %p76 = por %p74, %p75
      %p77 = scmp.ne.s32.totalorder %s69, %s72
      %p78 = scmp.eq.s32.totalorder %s17, 0
      %p79 = por %p77, %p78
      %p80 = scmp.ne.s32.totalorder %s69, %s72
      %p81 = scmp.eq.s32.totalorder %s22, 5
      %p82 = por %p80, %p81
      %p83 = scmp.ne.s32.totalorder %s72, %s73
      %p84 = scmp.eq.s32.totalorder %s22, 0
      %p85 = por %p83, %p84
      %p86 = scmp.ne.s32.totalorder %s72, %s73
      %p87 = scmp.eq.s32.totalorder %s23, 5
      %p88 = por %p86, %p87
      %p90 = scmp.ne.s32.totalorder %s73, %s89
      %p91 = scmp.eq.s32.totalorder %s23, 0
      %p92 = por %p90, %p91
      %s94 = sadd.s32 %s93, 1
      %p97 = scmp.eq.s32.totalorder %s17, 5
      %p98 = scmp.ne.s32.totalorder %s93, %s95
      %p99 = scmp.eq.s32.totalorder %s17, 0
      %p100 = por %p98, %p99
      %p101 = scmp.ne.s32.totalorder %s93, %s95
      %p102 = scmp.eq.s32.totalorder %s22, 5
      %p103 = por %p101, %p102
      %p104 = scmp.ne.s32.totalorder %s95, %s96
      %p105 = scmp.eq.s32.totalorder %s22, 0
      %p106 = por %p104, %p105
      %p107 = scmp.ne.s32.totalorder %s95, %s96
      %p108 = scmp.eq.s32.totalorder %s23, 5
      %p109 = por %p107, %p108
      %p111 = scmp.ne.s32.totalorder %s96, %s110
      %p112 = scmp.eq.s32.totalorder %s23, 0
      %p113 = por %p111, %p112
      %s115 = sadd.s32 %s114, 1
      %p118 = scmp.eq.s32.totalorder %s17, 5
      %p119 = scmp.ne.s32.totalorder %s114, %s116
      %p120 = scmp.eq.s32.totalorder %s17, 0
      %p121 = por %p119, %p120
      %p122 = scmp.ne.s32.totalorder %s114, %s116
      %p123 = scmp.eq.s32.totalorder %s22, 5
      %p124 = por %p122, %p123
      %p125 = scmp.ne.s32.totalorder %s116, %s117
      %p126 = scmp.eq.s32.totalorder %s22, 0
      %p127 = por %p125, %p126
      %p128 = scmp.ne.s32.totalorder %s116, %s117
      %p129 = scmp.eq.s32.totalorder %s23, 5
      %p130 = por %p128, %p129
      %p132 = scmp.ne.s32.totalorder %s117, %s131
      %p133 = scmp.eq.s32.totalorder %s23, 0
      %p134 = por %p132, %p133
      %s135 = ssub.s32 %s24, %s36
      %s136 = ssub.s32 %s25, %s32
      %s137 = sor.u32 %s135, %s136
      %p138 = scmp.eq.s32.totalorder %s137, 0
      %s140 = sadd.s32 %s139, 1
      %s141 = scalar_select %p138, %s139, %s140
      %p144 = pneg %p138
      %p145 = scmp.eq.s32.totalorder %s17, 5
      %p146 = por %p144, %p145
      %p147 = scmp.ne.s32.totalorder %s139, %s142
      %p148 = scmp.eq.s32.totalorder %s17, 0
      %p149 = por %p147, %p148
      %p150 = scmp.ne.s32.totalorder %s139, %s142
      %p151 = scmp.eq.s32.totalorder %s22, 5
      %p152 = por %p150, %p151
      %p153 = scmp.ne.s32.totalorder %s142, %s143
      %p154 = scmp.eq.s32.totalorder %s22, 0
      %p155 = por %p153, %p154
      %p156 = scmp.ne.s32.totalorder %s142, %s143
      %p157 = scmp.eq.s32.totalorder %s23, 5
      %p158 = por %p156, %p157
      %p160 = scmp.ne.s32.totalorder %s143, %s159
      %p161 = scmp.eq.s32.totalorder %s23, 0
      %p162 = por %p160, %p161
      %p163 = scmp.le.s32.totalorder 1, %s17
      %p164 = scmp.lt.s32.totalorder %s17, 7
      %p165 = pnand %p163, %p164
      %p166 = pneg %p165
      // Predicated region
      $region9: #{edge_loss.1} parent=5 // pred_check
        _
      $region10: #{edge_loss.1} parent=5 // pred_check_branch
        %168 = sbr.rel (%p165) target = $region12
      $region11: #{edge_loss.1} parent=5 // pred_region
        %s169 = ssub.s32 %s17, 1
        // Predicated region
        $region13: #{edge_loss.1} parent=11 // pred_check
          %p170 = pneg %p106
        $region14: #{edge_loss.1} parent=11 // pred_check_branch
          %172 = sbr.rel (%p170) target = $region16
        $region15: #{edge_loss.1} parent=11 // pred_region
          %174 = vsyncadd [#allocation5], 0
          %s175 = sshll.u32 %s2, 4
          %s176 = int_to_ptr.hbm [resolvable:$true] %s175
          %s177 = sshll.u32 [#allocation6], 4
          %s178 = int_to_ptr.vmem [resolvable:$true] %s177
          %183 = dma.hbm_to_vmem [thread:$0]  %s176, 256, %s178, [#allocation5], 128, 128, 8
        $region16: #{edge_loss.1} parent=11 // pred_fallthru
          _
        // Predicated region
        $region17: #{edge_loss.1} parent=11 // pred_check
          %p184 = pneg %p127
        $region18: #{edge_loss.1} parent=11 // pred_check_branch
          %186 = sbr.rel (%p184) target = $region20
        $region19: #{edge_loss.1} parent=11 // pred_region
          %188 = vsyncadd [#allocation8], 0
          %s189 = sshll.u32 %s3, 4
          %s190 = int_to_ptr.hbm [resolvable:$true] %s189
          %s191 = sshll.u32 [#allocation7], 4
          %s192 = int_to_ptr.vmem [resolvable:$true] %s191
          %197 = dma.hbm_to_vmem [thread:$0]  %s190, 256, %s192, [#allocation8], 128, 128, 8
        $region20: #{edge_loss.1} parent=11 // pred_fallthru
          _
      $region12: #{edge_loss.1} parent=5 // pred_fallthru
        _
      %p198 = scmp.lt.s32.totalorder %s17, 6
      // Predicated region
      $region21: #{edge_loss.1} parent=5 // pred_check
        %p199 = pneg %p198
      $region22: #{edge_loss.1} parent=5 // pred_check_branch
        %201 = sbr.rel (%p199) target = $region24
      $region23: #{edge_loss.1} parent=5 // pred_region
        // Predicated region
        $region25: #{edge_loss.1} parent=23 // pred_check
          %p202 = pneg %p51
        $region26: #{edge_loss.1} parent=23 // pred_check_branch
          %204 = sbr.rel (%p202) target = $region28
        $region27: #{edge_loss.1} parent=23 // pred_region
          %s205 = sand.u32 %s41, 1
          %s206 = scalar_lea.sflag [#allocation3], %s205
          %s207 = sand.u32 %s41, 1
          %s208 = smul.addr %s207, 16
          %s209 = scalar_lea.vmem [#allocation2], %s208
          %211 = vsyncadd %s206, 0
          %s212 = smul.addr %s25, 2
          %s213 = smul.addr %s24, 6
          %s214 = sadd.s32 %s212, %s213
          %s215 = smul.addr %s214, 8
          %s216 = scalar_lea.hbm %s0, %s215
          %s217 = sshll.u32 %s216, 4
          %s218 = int_to_ptr.hbm [resolvable:$true] %s217
          %s219 = sshll.u32 %s209, 4
          %s220 = int_to_ptr.vmem [resolvable:$true] %s219
          %225 = dma.hbm_to_vmem [thread:$0]  %s218, 256, %s220, %s206, 128, 128, 8
        $region28: #{edge_loss.1} parent=23 // pred_fallthru
          _
        // Predicated region
        $region29: #{edge_loss.1} parent=23 // pred_check
          %p226 = pneg %p79
        $region30: #{edge_loss.1} parent=23 // pred_check_branch
          %228 = sbr.rel (%p226) target = $region32
        $region31: #{edge_loss.1} parent=23 // pred_region
          %s229 = sand.u32 %s17, 1
          %s230 = scalar_lea.sflag [#allocation5], %s229
          %s231 = sand.u32 %s69, 1
          %s232 = smul.addr %s231, 16
          %s233 = scalar_lea.vmem [#allocation4], %s232
          %235 = vsyncadd %s230, 0
          %s236 = smul.addr %s25, 2
          %s237 = smul.addr %s24, 6
          %s238 = sadd.s32 %s236, %s237
          %s239 = smul.addr %s238, 8
          %s240 = scalar_lea.hbm %s1, %s239
          %s241 = sshll.u32 %s240, 4
          %s242 = int_to_ptr.hbm [resolvable:$true] %s241
          %s243 = sshll.u32 %s233, 4
          %s244 = int_to_ptr.vmem [resolvable:$true] %s243
          %249 = dma.hbm_to_vmem [thread:$0]  %s242, 256, %s244, %s230, 128, 128, 8
        $region32: #{edge_loss.1} parent=23 // pred_fallthru
          _
      $region24: #{edge_loss.1} parent=5 // pred_fallthru
        _
      %p250 = scmp.le.s32.totalorder 1, %s17
      %p251 = scmp.lt.s32.totalorder %s17, 7
      %p252 = pnand %p250, %p251
      %p253 = pneg %p252
      // Predicated region
      $region33: #{edge_loss.1} parent=5 // pred_check
        _
      $region34: #{edge_loss.1} parent=5 // pred_check_branch
        %255 = sbr.rel (%p252) target = $region36
      $region35: #{edge_loss.1} parent=5 // pred_region
        %s256 = ssub.s32 %s17, 1
        %s257 = sand.u32 %s44, 1
        %s258 = scalar_lea.sflag [#allocation3], %s257
        %s259 = sand.u32 %s44, 1
        %s260 = smul.addr %s259, 16
        %s261 = scalar_lea.vmem [#allocation2], %s260
        // Predicated region
        $region37: #{edge_loss.1} parent=35 // pred_check
          %p262 = pneg %p57
        $region38: #{edge_loss.1} parent=35 // pred_check_branch
          %264 = sbr.rel (%p262) target = $region40
        $region39: #{edge_loss.1} parent=35 // pred_region
          %266 = dma.done %s258, 256
        $region40: #{edge_loss.1} parent=35 // pred_fallthru
          _
        %s267 = sand.u32 %s22, 1
        %s268 = scalar_lea.sflag [#allocation5], %s267
        %s269 = sand.u32 %s72, 1
        %s270 = smul.addr %s269, 16
        %s271 = scalar_lea.vmem [#allocation4], %s270
        // Predicated region
        $region41: #{edge_loss.1} parent=35 // pred_check
          %p272 = pneg %p85
        $region42: #{edge_loss.1} parent=35 // pred_check_branch
          %274 = sbr.rel (%p272) target = $region44
        $region43: #{edge_loss.1} parent=35 // pred_region
          %276 = dma.done %s268, 256
        $region44: #{edge_loss.1} parent=35 // pred_fallthru
          _
        // Predicated region
        $region45: #{edge_loss.1} parent=35 // pred_check
          %p277 = pneg %p106
        $region46: #{edge_loss.1} parent=35 // pred_check_branch
          %279 = sbr.rel (%p277) target = $region48
        $region47: #{edge_loss.1} parent=35 // pred_region
          %281 = dma.done [#allocation5], 256
        $region48: #{edge_loss.1} parent=35 // pred_fallthru
          _
        // Predicated region
        $region49: #{edge_loss.1} parent=35 // pred_check
          %p282 = pneg %p127
        $region50: #{edge_loss.1} parent=35 // pred_check_branch
          %284 = sbr.rel (%p282) target = $region52
        $region51: #{edge_loss.1} parent=35 // pred_region
          %286 = dma.done [#allocation8], 256
        $region52: #{edge_loss.1} parent=35 // pred_fallthru
          _
        %s287 = sand.u32 %s44, 1
        %s288 = scalar_lea.sflag [#allocation3], %s287
        %s289 = sand.u32 %s44, 1
        %s290 = smul.addr %s289, 16
        %s291 = scalar_lea.vmem [#allocation2], %s290
        %p292 = pneg %p57
        %p293 = pneg %p54
        %s294 = sand.u32 %s22, 1
        %s295 = scalar_lea.sflag [#allocation5], %s294
        %s296 = sand.u32 %s72, 1
        %s297 = smul.addr %s296, 16
        %s298 = scalar_lea.vmem [#allocation4], %s297
        %p299 = pneg %p85
        %p300 = pneg %p82
        %p301 = pneg %p106
        %p302 = pneg %p103
        %p303 = pneg %p127
        %p304 = pneg %p124
        %p305 = pneg %p155
        %p306 = pneg %p152
        %p307 = scmp.lt.s32.totalorder %s26, 1
        %s308 = scalar_select %p307, %s26, 1
        %p309 = scmp.lt.s32.totalorder %s27, 2
        %s310 = scalar_select %p309, %s27, 2
        %s311 = smul.addr %s308, 3
        %s312 = sadd.s32 %s310, %s311
        %s313 = scalar_lea.vmem %s4, %s312
        %p314 = scmp.lt.s32.totalorder %s26, 1
        %s315 = scalar_select %p314, %s26, 1
        %p316 = scmp.lt.s32.totalorder %s27, 2
        %s317 = scalar_select %p316, %s27, 2
        %s318 = smul.addr %s315, 3
        %s319 = sadd.s32 %s317, %s318
        %s320 = scalar_lea.vmem %s4, %s319
        %v321 = vld [vmem:[%s261] sm:$0xff]
        %v322 = vld [vmem:[%s261 + $0x8] sm:$0xff]
        %v323 = vld [vmem:[%s271] sm:$0xff]
        %v324 = vld [vmem:[%s271 + $0x8] sm:$0xff]
        %v325 = vsub.f32 %v321, %v323
        %v326 = vsub.f32 %v322, %v324
        %v327 = vld [vmem:[#allocation6] sm:$0xff]
        %v328 = vld [vmem:[#allocation6 + $0x8] sm:$0xff]
        %vm329 = vcmask 130048
        %v331 = vsel %vm329, %v327, 0
        %v334 = vsel %vm329, %v328, 0
        %336 = vmatpush.msra.mxu0 0.0
        %337 = vmatpush.msra.mxu0 0.0
        %338 = vmatpush.msra.mxu0 0.0
        %339 = vmatpush.msra.mxu0 0.0
        %340 = vmatpush.msra.mxu0 0.0
        %341 = vmatpush.msra.mxu0 0.0
        %342 = vmatpush.msra.mxu0 0.0
        %343 = vmatpush.msra.mxu0 0.0
        %344 = vmatpush.msra.mxu0 0.0
        %345 = vmatpush.msra.mxu0 0.0
        %346 = vmatpush.msra.mxu0 0.0
        %347 = vmatpush.msra.mxu0 0.0
        %348 = vmatpush.msra.mxu0 0.0
        %349 = vmatpush.msra.mxu0 0.0
        %v350 = vand.u32 %v326, 4294901760
        %351 = vmatpush.msra.mxu0 %v350
        %v352 = vand.u32 %v325, 4294901760
        %353 = vmatpush.msra.mxu0 %v352
        %v354 = vand.u32 %v331, 4294901760
        %v355 = vsub.f32 %v331, %v354
        %v356 = vand.u32 %v355, 4294901760
        %v357 = vsub.f32 %v355, %v356
        %v358 = vand.u32 %v357, 4294901760
        %359 = vmatmul.f32.gmra.mxu0 %v358
        %v360 = vpop.f32.mrf.mxu0
        %v361 = vadd.f32 0.0, %v360
        %v362 = vand.u32 %v334, 4294901760
        %v363 = vsub.f32 %v334, %v362
        %v364 = vand.u32 %v363, 4294901760
        %v365 = vsub.f32 %v363, %v364
        %v366 = vand.u32 %v365, 4294901760
        %367 = vmatmul.f32.gmra.mxu0 %v366
        %v368 = vpop.f32.mrf.mxu0
        %v369 = vadd.f32 0.0, %v368
        %370 = vdwg.mxu0
        %371 = vmatpush.msra.mxu0 0.0
        %372 = vmatpush.msra.mxu0 0.0
        %373 = vmatpush.msra.mxu0 0.0
        %374 = vmatpush.msra.mxu0 0.0
        %375 = vmatpush.msra.mxu0 0.0
        %376 = vmatpush.msra.mxu0 0.0
        %377 = vmatpush.msra.mxu0 0.0
        %378 = vmatpush.msra.mxu0 0.0
        %379 = vmatpush.msra.mxu0 0.0
        %380 = vmatpush.msra.mxu0 0.0
        %381 = vmatpush.msra.mxu0 0.0
        %382 = vmatpush.msra.mxu0 0.0
        %383 = vmatpush.msra.mxu0 0.0
        %384 = vmatpush.msra.mxu0 0.0
        %v385 = vand.u32 %v326, 4294901760
        %v386 = vsub.f32 %v326, %v385
        %v387 = vand.u32 %v386, 4294901760
        %v388 = vsub.f32 %v386, %v387
        %v389 = vand.u32 %v388, 4294901760
        %390 = vmatpush.msra.mxu0 %v389
        %v391 = vand.u32 %v325, 4294901760
        %v392 = vsub.f32 %v325, %v391
        %v393 = vand.u32 %v392, 4294901760
        %v394 = vsub.f32 %v392, %v393
        %v395 = vand.u32 %v394, 4294901760
        %396 = vmatpush.msra.mxu0 %v395
        %v397 = vand.u32 %v331, 4294901760
        %398 = vmatmul.f32.gmra.mxu0 %v397
        %v399 = vpop.f32.mrf.mxu0
        %v400 = vadd.f32 %v361, %v399
        %v401 = vand.u32 %v334, 4294901760
        %402 = vmatmul.f32.gmra.mxu0 %v401
        %v403 = vpop.f32.mrf.mxu0
        %v404 = vadd.f32 %v369, %v403
        %405 = vdwg.mxu0
        %406 = vmatpush.msra.mxu0 0.0
        %407 = vmatpush.msra.mxu0 0.0
        %408 = vmatpush.msra.mxu0 0.0
        %409 = vmatpush.msra.mxu0 0.0
        %410 = vmatpush.msra.mxu0 0.0
        %411 = vmatpush.msra.mxu0 0.0
        %412 = vmatpush.msra.mxu0 0.0
        %413 = vmatpush.msra.mxu0 0.0
        %414 = vmatpush.msra.mxu0 0.0
        %415 = vmatpush.msra.mxu0 0.0
        %416 = vmatpush.msra.mxu0 0.0
        %417 = vmatpush.msra.mxu0 0.0
        %418 = vmatpush.msra.mxu0 0.0
        %419 = vmatpush.msra.mxu0 0.0
        %v420 = vand.u32 %v326, 4294901760
        %v421 = vsub.f32 %v326, %v420
        %422 = vmatpush.msra.mxu0 %v421
        %v423 = vand.u32 %v325, 4294901760
        %v424 = vsub.f32 %v325, %v423
        %425 = vmatpush.msra.mxu0 %v424
        %v426 = vand.u32 %v331, 4294901760
        %v427 = vsub.f32 %v331, %v426
        %428 = vmatmul.f32.gmra.mxu0 %v427
        %v429 = vpop.f32.mrf.mxu0
        %v430 = vadd.f32 %v400, %v429
        %v431 = vand.u32 %v334, 4294901760
        %v432 = vsub.f32 %v334, %v431
        %433 = vmatmul.f32.gmra.mxu0 %v432
        %v434 = vpop.f32.mrf.mxu0
        %v435 = vadd.f32 %v404, %v434
        %436 = vdwg.mxu0
        %437 = vmatpush.msra.mxu0 0.0
        %438 = vmatpush.msra.mxu0 0.0
        %439 = vmatpush.msra.mxu0 0.0
        %440 = vmatpush.msra.mxu0 0.0
        %441 = vmatpush.msra.mxu0 0.0
        %442 = vmatpush.msra.mxu0 0.0
        %443 = vmatpush.msra.mxu0 0.0
        %444 = vmatpush.msra.mxu0 0.0
        %445 = vmatpush.msra.mxu0 0.0
        %446 = vmatpush.msra.mxu0 0.0
        %447 = vmatpush.msra.mxu0 0.0
        %448 = vmatpush.msra.mxu0 0.0
        %449 = vmatpush.msra.mxu0 0.0
        %450 = vmatpush.msra.mxu0 0.0
        %v451 = vand.u32 %v326, 4294901760
        %452 = vmatpush.msra.mxu0 %v451
        %v453 = vand.u32 %v325, 4294901760
        %454 = vmatpush.msra.mxu0 %v453
        %v455 = vand.u32 %v331, 4294901760
        %v456 = vsub.f32 %v331, %v455
        %v457 = vand.u32 %v456, 4294901760
        %458 = vmatmul.f32.gmra.mxu0 %v457
        %v459 = vpop.f32.mrf.mxu0
        %v460 = vadd.f32 %v430, %v459
        %v461 = vand.u32 %v334, 4294901760
        %v462 = vsub.f32 %v334, %v461
        %v463 = vand.u32 %v462, 4294901760
        %464 = vmatmul.f32.gmra.mxu0 %v463
        %v465 = vpop.f32.mrf.mxu0
        %v466 = vadd.f32 %v435, %v465
        %467 = vdwg.mxu0
        %468 = vmatpush.msra.mxu0 0.0
        %469 = vmatpush.msra.mxu0 0.0
        %470 = vmatpush.msra.mxu0 0.0
        %471 = vmatpush.msra.mxu0 0.0
        %472 = vmatpush.msra.mxu0 0.0
        %473 = vmatpush.msra.mxu0 0.0
        %474 = vmatpush.msra.mxu0 0.0
        %475 = vmatpush.msra.mxu0 0.0
        %476 = vmatpush.msra.mxu0 0.0
        %477 = vmatpush.msra.mxu0 0.0
        %478 = vmatpush.msra.mxu0 0.0
        %479 = vmatpush.msra.mxu0 0.0
        %480 = vmatpush.msra.mxu0 0.0
        %481 = vmatpush.msra.mxu0 0.0
        %v482 = vand.u32 %v326, 4294901760
        %v483 = vsub.f32 %v326, %v482
        %v484 = vand.u32 %v483, 4294901760
        %485 = vmatpush.msra.mxu0 %v484
        %v486 = vand.u32 %v325, 4294901760
        %v487 = vsub.f32 %v325, %v486
        %v488 = vand.u32 %v487, 4294901760
        %489 = vmatpush.msra.mxu0 %v488
        %v490 = vand.u32 %v331, 4294901760
        %491 = vmatmul.f32.gmra.mxu0 %v490
        %v492 = vpop.f32.mrf.mxu0
        %v493 = vadd.f32 %v460, %v492
        %v494 = vand.u32 %v334, 4294901760
        %495 = vmatmul.f32.gmra.mxu0 %v494
        %v496 = vpop.f32.mrf.mxu0
        %v497 = vadd.f32 %v466, %v496
        %498 = vdwg.mxu0
        %499 = vmatpush.msra.mxu0 0.0
        %500 = vmatpush.msra.mxu0 0.0
        %501 = vmatpush.msra.mxu0 0.0
        %502 = vmatpush.msra.mxu0 0.0
        %503 = vmatpush.msra.mxu0 0.0
        %504 = vmatpush.msra.mxu0 0.0
        %505 = vmatpush.msra.mxu0 0.0
        %506 = vmatpush.msra.mxu0 0.0
        %507 = vmatpush.msra.mxu0 0.0
        %508 = vmatpush.msra.mxu0 0.0
        %509 = vmatpush.msra.mxu0 0.0
        %510 = vmatpush.msra.mxu0 0.0
        %511 = vmatpush.msra.mxu0 0.0
        %512 = vmatpush.msra.mxu0 0.0
        %v513 = vand.u32 %v326, 4294901760
        %514 = vmatpush.msra.mxu0 %v513
        %v515 = vand.u32 %v325, 4294901760
        %516 = vmatpush.msra.mxu0 %v515
        %v517 = vand.u32 %v331, 4294901760
        %518 = vmatmul.f32.gmra.mxu0 %v517
        %v519 = vpop.f32.mrf.mxu0
        %v520 = vadd.f32 %v493, %v519
        %v521 = vand.u32 %v334, 4294901760
        %522 = vmatmul.f32.gmra.mxu0 %v521
        %v523 = vpop.f32.mrf.mxu0
        %v524 = vadd.f32 %v497, %v523
        %525 = vdwg.mxu0
        %v526 = vld [vmem:[#allocation7] sm:$0xff]
        %v527 = vld [vmem:[#allocation7 + $0x8] sm:$0xff]
        %v529 = vsel %vm329, %v520, 0
        %v532 = vsel %vm329, %v524, 0
        %534 = vmatpush.msra.mxu0 0.0
        %535 = vmatpush.msra.mxu0 0.0
        %536 = vmatpush.msra.mxu0 0.0
        %537 = vmatpush.msra.mxu0 0.0
        %538 = vmatpush.msra.mxu0 0.0
        %539 = vmatpush.msra.mxu0 0.0
        %540 = vmatpush.msra.mxu0 0.0
        %541 = vmatpush.msra.mxu0 0.0
        %542 = vmatpush.msra.mxu0 0.0
        %543 = vmatpush.msra.mxu0 0.0
        %544 = vmatpush.msra.mxu0 0.0
        %545 = vmatpush.msra.mxu0 0.0
        %546 = vmatpush.msra.mxu0 0.0
        %547 = vmatpush.msra.mxu0 0.0
        %v548 = vand.u32 %v527, 4294901760
        %549 = vmatpush.msra.mxu0 %v548
        %v550 = vand.u32 %v526, 4294901760
        %551 = vmatpush.msra.mxu0 %v550
        %v552 = vand.u32 %v529, 4294901760
        %v553 = vsub.f32 %v529, %v552
        %v554 = vand.u32 %v553, 4294901760
        %v555 = vsub.f32 %v553, %v554
        %v556 = vand.u32 %v555, 4294901760
        %557 = vmatmul.f32.gmra.mxu0 %v556
        %v558 = vpop.f32.mrf.mxu0
        %v559 = vadd.f32 0.0, %v558
        %v560 = vand.u32 %v532, 4294901760
        %v561 = vsub.f32 %v532, %v560
        %v562 = vand.u32 %v561, 4294901760
        %v563 = vsub.f32 %v561, %v562
        %v564 = vand.u32 %v563, 4294901760
        %565 = vmatmul.f32.gmra.mxu0 %v564
        %v566 = vpop.f32.mrf.mxu0
        %v567 = vadd.f32 0.0, %v566
        %568 = vdwg.mxu0
        %569 = vmatpush.msra.mxu0 0.0
        %570 = vmatpush.msra.mxu0 0.0
        %571 = vmatpush.msra.mxu0 0.0
        %572 = vmatpush.msra.mxu0 0.0
        %573 = vmatpush.msra.mxu0 0.0
        %574 = vmatpush.msra.mxu0 0.0
        %575 = vmatpush.msra.mxu0 0.0
        %576 = vmatpush.msra.mxu0 0.0
        %577 = vmatpush.msra.mxu0 0.0
        %578 = vmatpush.msra.mxu0 0.0
        %579 = vmatpush.msra.mxu0 0.0
        %580 = vmatpush.msra.mxu0 0.0
        %581 = vmatpush.msra.mxu0 0.0
        %582 = vmatpush.msra.mxu0 0.0
        %v583 = vand.u32 %v527, 4294901760
        %v584 = vsub.f32 %v527, %v583
        %v585 = vand.u32 %v584, 4294901760
        %v586 = vsub.f32 %v584, %v585
        %v587 = vand.u32 %v586, 4294901760
        %588 = vmatpush.msra.mxu0 %v587
        %v589 = vand.u32 %v526, 4294901760
        %v590 = vsub.f32 %v526, %v589
        %v591 = vand.u32 %v590, 4294901760
        %v592 = vsub.f32 %v590, %v591
        %v593 = vand.u32 %v592, 4294901760
        %594 = vmatpush.msra.mxu0 %v593
        %v595 = vand.u32 %v529, 4294901760
        %596 = vmatmul.f32.gmra.mxu0 %v595
        %v597 = vpop.f32.mrf.mxu0
        %v598 = vadd.f32 %v559, %v597
        %v599 = vand.u32 %v532, 4294901760
        %600 = vmatmul.f32.gmra.mxu0 %v599
        %v601 = vpop.f32.mrf.mxu0
        %v602 = vadd.f32 %v567, %v601
        %603 = vdwg.mxu0
        %604 = vmatpush.msra.mxu0 0.0
        %605 = vmatpush.msra.mxu0 0.0
        %606 = vmatpush.msra.mxu0 0.0
        %607 = vmatpush.msra.mxu0 0.0
        %608 = vmatpush.msra.mxu0 0.0
        %609 = vmatpush.msra.mxu0 0.0
        %610 = vmatpush.msra.mxu0 0.0
        %611 = vmatpush.msra.mxu0 0.0
        %612 = vmatpush.msra.mxu0 0.0
        %613 = vmatpush.msra.mxu0 0.0
        %614 = vmatpush.msra.mxu0 0.0
        %615 = vmatpush.msra.mxu0 0.0
        %616 = vmatpush.msra.mxu0 0.0
        %617 = vmatpush.msra.mxu0 0.0
        %v618 = vand.u32 %v527, 4294901760
        %v619 = vsub.f32 %v527, %v618
        %620 = vmatpush.msra.mxu0 %v619
        %v621 = vand.u32 %v526, 4294901760
        %v622 = vsub.f32 %v526, %v621
        %623 = vmatpush.msra.mxu0 %v622
        %v624 = vand.u32 %v529, 4294901760
        %v625 = vsub.f32 %v529, %v624
        %626 = vmatmul.f32.gmra.mxu0 %v625
        %v627 = vpop.f32.mrf.mxu0
        %v628 = vadd.f32 %v598, %v627
        %v629 = vand.u32 %v532, 4294901760
        %v630 = vsub.f32 %v532, %v629
        %631 = vmatmul.f32.gmra.mxu0 %v630
        %v632 = vpop.f32.mrf.mxu0
        %v633 = vadd.f32 %v602, %v632
        %634 = vdwg.mxu0
        %635 = vmatpush.msra.mxu0 0.0
        %636 = vmatpush.msra.mxu0 0.0
        %637 = vmatpush.msra.mxu0 0.0
        %638 = vmatpush.msra.mxu0 0.0
        %639 = vmatpush.msra.mxu0 0.0
        %640 = vmatpush.msra.mxu0 0.0
        %641 = vmatpush.msra.mxu0 0.0
        %642 = vmatpush.msra.mxu0 0.0
        %643 = vmatpush.msra.mxu0 0.0
        %644 = vmatpush.msra.mxu0 0.0
        %645 = vmatpush.msra.mxu0 0.0
        %646 = vmatpush.msra.mxu0 0.0
        %647 = vmatpush.msra.mxu0 0.0
        %648 = vmatpush.msra.mxu0 0.0
        %v649 = vand.u32 %v527, 4294901760
        %650 = vmatpush.msra.mxu0 %v649
        %v651 = vand.u32 %v526, 4294901760
        %652 = vmatpush.msra.mxu0 %v651
        %v653 = vand.u32 %v529, 4294901760
        %v654 = vsub.f32 %v529, %v653
        %v655 = vand.u32 %v654, 4294901760
        %656 = vmatmul.f32.gmra.mxu0 %v655
        %v657 = vpop.f32.mrf.mxu0
        %v658 = vadd.f32 %v628, %v657
        %v659 = vand.u32 %v532, 4294901760
        %v660 = vsub.f32 %v532, %v659
        %v661 = vand.u32 %v660, 4294901760
        %662 = vmatmul.f32.gmra.mxu0 %v661
        %v663 = vpop.f32.mrf.mxu0
        %v664 = vadd.f32 %v633, %v663
        %665 = vdwg.mxu0
        %666 = vmatpush.msra.mxu0 0.0
        %667 = vmatpush.msra.mxu0 0.0
        %668 = vmatpush.msra.mxu0 0.0
        %669 = vmatpush.msra.mxu0 0.0
        %670 = vmatpush.msra.mxu0 0.0
        %671 = vmatpush.msra.mxu0 0.0
        %672 = vmatpush.msra.mxu0 0.0
        %673 = vmatpush.msra.mxu0 0.0
        %674 = vmatpush.msra.mxu0 0.0
        %675 = vmatpush.msra.mxu0 0.0
        %676 = vmatpush.msra.mxu0 0.0
        %677 = vmatpush.msra.mxu0 0.0
        %678 = vmatpush.msra.mxu0 0.0
        %679 = vmatpush.msra.mxu0 0.0
        %v680 = vand.u32 %v527, 4294901760
        %v681 = vsub.f32 %v527, %v680
        %v682 = vand.u32 %v681, 4294901760
        %683 = vmatpush.msra.mxu0 %v682
        %v684 = vand.u32 %v526, 4294901760
        %v685 = vsub.f32 %v526, %v684
        %v686 = vand.u32 %v685, 4294901760
        %687 = vmatpush.msra.mxu0 %v686
        %v688 = vand.u32 %v529, 4294901760
        %689 = vmatmul.f32.gmra.mxu0 %v688
        %v690 = vpop.f32.mrf.mxu0
        %v691 = vadd.f32 %v658, %v690
        %v692 = vand.u32 %v532, 4294901760
        %693 = vmatmul.f32.gmra.mxu0 %v692
        %v694 = vpop.f32.mrf.mxu0
        %v695 = vadd.f32 %v664, %v694
        %696 = vdwg.mxu0
        %697 = vmatpush.msra.mxu0 0.0
        %698 = vmatpush.msra.mxu0 0.0
        %699 = vmatpush.msra.mxu0 0.0
        %700 = vmatpush.msra.mxu0 0.0
        %701 = vmatpush.msra.mxu0 0.0
        %702 = vmatpush.msra.mxu0 0.0
        %703 = vmatpush.msra.mxu0 0.0
        %704 = vmatpush.msra.mxu0 0.0
        %705 = vmatpush.msra.mxu0 0.0
        %706 = vmatpush.msra.mxu0 0.0
        %707 = vmatpush.msra.mxu0 0.0
        %708 = vmatpush.msra.mxu0 0.0
        %709 = vmatpush.msra.mxu0 0.0
        %710 = vmatpush.msra.mxu0 0.0
        %v711 = vand.u32 %v527, 4294901760
        %712 = vmatpush.msra.mxu0 %v711
        %v713 = vand.u32 %v526, 4294901760
        %714 = vmatpush.msra.mxu0 %v713
        %v715 = vand.u32 %v529, 4294901760
        %716 = vmatmul.f32.gmra.mxu0 %v715
        %v717 = vpop.f32.mrf.mxu0
        %v718 = vadd.f32 %v691, %v717
        %v719 = vand.u32 %v532, 4294901760
        %720 = vmatmul.f32.gmra.mxu0 %v719
        %v721 = vpop.f32.mrf.mxu0
        %v722 = vadd.f32 %v695, %v721
        %723 = vdwg.mxu0
        %v724 = vsub.f32 %v325, %v718
        %v725 = vsub.f32 %v326, %v722
        %v726 = vmul.f32 %v724, %v724
        %v727 = vmul.f32 %v725, %v725
        %v728 = vadd.f32 %v726, 1e-06
        %v729 = vadd.f32 %v727, 1e-06
        %v730 = vrsqrt.pop %v728
        %v731 = vmul.f32 %v730, %v728
        %v732 = vmul.f32 %v731, %v730
        %v733 = vmul.f32 0.5, %v732
        %v734 = vsub.f32 1.5, %v733
        %v735 = vmul.f32 %v730, %v734
        %v736 = vmul.f32 %v728, %v735
        %vm737 = vcmp.eq.f32.partialorder %v728, inf
        %v738 = vsel %vm737, %v728, %v736
        %vm739 = vcmp.eq.f32.partialorder %v728, 0.0
        %v740 = vand.u32 %v728, 2147483648
        %v741 = vsel %vm739, %v740, %v738
        %v742 = vrsqrt.pop %v729
        %v743 = vmul.f32 %v742, %v729
        %v744 = vmul.f32 %v743, %v742
        %v745 = vmul.f32 0.5, %v744
        %v746 = vsub.f32 1.5, %v745
        %v747 = vmul.f32 %v742, %v746
        %v748 = vmul.f32 %v729, %v747
        %vm749 = vcmp.eq.f32.partialorder %v729, inf
        %v750 = vsel %vm749, %v729, %v748
        %vm751 = vcmp.eq.f32.partialorder %v729, 0.0
        %v752 = vand.u32 %v729, 2147483648
        %v753 = vsel %vm751, %v752, %v750
        %v754 = vsel %vm329, %v741, 0.0
        %v755 = vsel %vm329, %v753, 0.0
        %v756 = vadd.f32 %v754, %v755
        %757 = vadd.xlane.f32.xlu0 %v756
        %v758 = vpop.xlane.xlu0 %757
        %v759 = vrot.slane %v758, 4
        %v760 = vadd.f32 %v758, %v759
        %v761 = vrot.slane %v760, 2
        %v762 = vadd.f32 %v760, %v761
        %v763 = vrot.slane %v762, 1
        %v764 = vadd.f32 %v762, %v763
        %s765 = vtos %v764
        %v766 = vstv %s765
        %vm767 = vcmask 0
        %768 = vst.msk [vmem:[%s320] sm:$0x1] %vm767, %v766
        %p769 = scmp.lt.s32.totalorder %s26, 1
        %s770 = scalar_select %p769, %s26, 1
        %p771 = scmp.lt.s32.totalorder %s27, 2
        %s772 = scalar_select %p771, %s27, 2
        %s773 = smul.addr %s770, 3
        %s774 = sadd.s32 %s772, %s773
        %s775 = scalar_lea.vmem %s4, %s774
        // Predicated region
        $region53: #{edge_loss.1} parent=35 // pred_check
          %p776 = pneg %p152
        $region54: #{edge_loss.1} parent=35 // pred_check_branch
          %778 = sbr.rel (%p776) target = $region56
        $region55: #{edge_loss.1} parent=35 // pred_region
          _
        $region56: #{edge_loss.1} parent=35 // pred_fallthru
          _
      $region36: #{edge_loss.1} parent=5 // pred_fallthru
        _
      %p779 = scmp.le.s32.totalorder 2, %s17
      // Predicated region
      $region57: #{edge_loss.1} parent=5 // pred_check
        %p780 = pneg %p779
      $region58: #{edge_loss.1} parent=5 // pred_check_branch
        %782 = sbr.rel (%p780) target = $region60
      $region59: #{edge_loss.1} parent=5 // pred_region
        %s783 = ssub.s32 %s17, 2
        // Predicated region
        $region61: #{edge_loss.1} parent=59 // pred_check
          %p784 = pneg %p158
        $region62: #{edge_loss.1} parent=59 // pred_check_branch
          %786 = sbr.rel (%p784) target = $region64
        $region63: #{edge_loss.1} parent=59 // pred_region
          %p787 = scmp.lt.s32.totalorder %s28, 1
          %s788 = scalar_select %p787, %s28, 1
          %p789 = scmp.lt.s32.totalorder %s29, 2
          %s790 = scalar_select %p789, %s29, 2
          %s791 = smul.addr %s788, 3
          %s792 = sadd.s32 %s790, %s791
          %s793 = scalar_lea.vmem %s4, %s792
        $region64: #{edge_loss.1} parent=59 // pred_fallthru
          _
      $region60: #{edge_loss.1} parent=5 // pred_fallthru
        _
    $region6: #{edge_loss.1} parent=1 // loop_footer
      %s21 = sadd.s32 1, %s17
    $region7: #{edge_loss.1} parent=1 // loop_footer_branch
      %16 = sbr.rel target = $region3
    $region8: #{edge_loss.1} parent=1 // loop_exit
      _
    %794 = vsyncpa [#allocation3], 1
    %s795 = scalar_lea.sflag [#allocation3], 1
    %796 = vsyncpa %s795, 1
    %797 = vsyncpa [#allocation5], 1
    %s798 = scalar_lea.sflag [#allocation5], 1
    %799 = vsyncpa %s798, 1
    %800 = vsyncpa [#allocation8], 1

</llo_original>
